<compile_context>
chip_gen: v7x
topology: tpu7x:2x2x1
jax: 0.10.0
libtpu: 0.0.40
codegen_flags: <defaults>
</compile_context>

<pallas_src>
import functools

import jax
import jax.numpy as jnp
from jax import lax
from jax.experimental import pallas as pl
from jax.experimental.pallas import tpu as pltpu


# --------------------------------------------------------------------------- #
# Kernels
# --------------------------------------------------------------------------- #
def _bn_fused_kernel(x_ref, w_ref, b_ref, y_ref, mean_ref, var_ref, *, eps, n_total):
    # x block: (Nb, tc, L) in native layout — L on lanes, channels on sublanes.
    xa = x_ref[...].astype(jnp.float32)              # f32 accumulation (no-op for f32 x)
    ps = jnp.sum(xa, axis=0)                         # (tc, L)  VPU adds over batch
    pq = jnp.sum(xa * xa, axis=0)                    # (tc, L)
    # TODO(synk): stream the N reduction (fori_loop over x_ref[n]) to avoid the
    # transient full-block f32 copy for bf16/int8 inputs (budgeted for in _block_bytes).
    xsum = jnp.sum(ps, axis=1, keepdims=True)        # (tc, 1)  one XLU lane-reduce / stat
    xsq = jnp.sum(pq, axis=1, keepdims=True)         # (tc, 1)

    m = jnp.float32(n_total)
    mean = xsum / m
    sumvar = jnp.maximum(xsq - xsum * xsum / m, 0.0)      # clamp single-pass cancellation
    inv_std = lax.rsqrt(sumvar / m + jnp.float32(eps))    # EUP rsqrt (otherwise-idle slot)

    gamma = w_ref[...].astype(jnp.float32)            # (tc, 1)
    beta = b_ref[...].astype(jnp.float32)
    scale_c = gamma * inv_std                         # fold affine into one FMA
    shift_c = beta - mean * scale_c
    scale = scale_c.reshape(1, -1, 1)                 # (1, tc, 1) broadcast operands
    shift = shift_c.reshape(1, -1, 1)

    # Re-read the VMEM-resident block: the f32 copy above is not live across this FMA.
    y_ref[...] = (x_ref[...].astype(jnp.float32) * scale + shift).astype(y_ref.dtype)

    mean_ref[...] = mean
    var_ref[...] = sumvar / jnp.float32(max(n_total - 1, 1))   # unbiased, for running_var


def _bn_stats_kernel(x_ref, sum_ref, sq_ref):
    # grid = (C_tiles, N_tiles); N axis is the reduction ("arbitrary", last) axis.
    @pl.when(pl.program_id(1) == 0)
    def _():
        sum_ref[...] = jnp.zeros_like(sum_ref)
        sq_ref[...] = jnp.zeros_like(sq_ref)

    xa = x_ref[...].astype(jnp.float32)               # (tn, tc, L)
    ps = jnp.sum(xa, axis=0)                          # (tc, L)
    pq = jnp.sum(xa * xa, axis=0)
    sum_ref[...] += jnp.sum(ps, axis=1, keepdims=True)   # (tc, 1) accumulator output
    sq_ref[...] += jnp.sum(pq, axis=1, keepdims=True)


def _bn_norm_kernel(x_ref, scale_ref, shift_ref, y_ref):
    scale = scale_ref[...].astype(jnp.float32).reshape(1, -1, 1)
    shift = shift_ref[...].astype(jnp.float32).reshape(1, -1, 1)
    y_ref[...] = (x_ref[...].astype(jnp.float32) * scale + shift).astype(y_ref.dtype)


# --------------------------------------------------------------------------- #
# VMEM budgeting / tiling plan
# --------------------------------------------------------------------------- #
def _vmem_plan():
    try:
        cap = int(pltpu.get_tpu_info().vmem_capacity_bytes)
    except Exception:
        cap = 64 * 1024 * 1024            # conservative default (v7x per-core VMEM)
    vmem_limit = min(cap // 2, 64 * 1024 * 1024)   # 32 MiB on v7x, 64 MiB on v5e/v6e
    block_budget = max(vmem_limit - (4 << 20), 1 << 20)  # margin: params/stats/compiler scratch
    return vmem_limit, block_budget


def _block_bytes(nrows, tc, L, itemsize):
    """Modelled peak VMEM per grid step: double-buffered x & y blocks, transient
    f32 block temps, and the (tc, L) f32 reduction partials."""
    xblk = nrows * tc * L * itemsize
    f32_blk = nrows * tc * L * 4
    cast_tmp = f32_blk if itemsize < 4 else 0     # f32 copy of the block for bf16/int8 x
    temps = 2 * f32_blk                           # x*x reduce operand + normalize FMA result
    partials = 2 * tc * L * 4                     # per-channel sum / sum-of-squares rows
    small = 16 * tc * 4                           # gamma/beta/mean/var blocks
    return 4 * xblk + cast_tmp + temps + partials + small


def _plan(N, C, L, itemsize, block_budget):
    """Returns ("fused", tc) | ("two_phase", tc, tn) | ("pad",)."""
    mult8 = [t for t in range(8, C, 8) if C % t == 0]   # proper divisors -> grid >= 2
    fitting = [t for t in mult8 if _block_bytes(N, t, L, itemsize) <= block_budget]
    if fitting:
        # prefer an even step count (>= 4 when possible) for v7x two-core balance,
        # then the largest tile (fewest grid steps / biggest DMAs).
        def pref(t):
            steps = C // t
            return (steps % 2 == 0 and steps >= 4, steps % 2 == 0, t)
        return ("fused", max(fitting, key=pref))
    if not mult8 and _block_bytes(N, C, L, itemsize) <= block_budget:
        return ("fused", C)                       # tiny / odd C: single full-C block
    if C % 8 != 0:
        return ("pad",)                           # pad channels to a multiple of 8, re-plan
    # Two-phase: stats accumulation over an N grid axis, then a normalize pass.
    tc = None
    for t in sorted(mult8 or [C], reverse=True):
        if _block_bytes(1, t, L, itemsize) <= block_budget:
            tc = t
            break
    if tc is None:
        tc = 8
        # TODO(synk): add an L grid axis for enormous L where even a (1, 8, L) strip
        # overflows the VMEM budget.
    tn = 1
    for t in range(N, 0, -1):
        if N % t == 0 and _block_bytes(t, tc, L, itemsize) <= block_budget:
            tn = t
            break
    return ("two_phase", tc, tn)


# --------------------------------------------------------------------------- #
# Wrappers
# --------------------------------------------------------------------------- #
def sync_batchnorm1d_train(x, weight, bias, running_mean, running_var,
                           eps=1e-5, momentum=0.1, channel_tile=None,
                           max_block_bytes=None):
    """Training-mode forward of encoding.nn.BatchNorm1d.  x: (N, C, L).
    Returns (y, new_running_mean, new_running_var)."""
    N, C, L = x.shape
    n_total = N * L
    itemsize = jnp.dtype(x.dtype).itemsize
    vmem_limit, block_budget = _vmem_plan()
    if max_block_bytes is not None:
        block_budget = int(max_block_bytes)

    if channel_tile is not None:
        assert C % channel_tile == 0 and (channel_tile % 8 == 0 or channel_tile == C)
        plan = ("fused", channel_tile)
    else:
        plan = _plan(N, C, L, itemsize, block_budget)

    if plan[0] == "pad":
        # C not 8-divisible and too large for a single full-C strip: pad channels.
        Cp = ((C + 7) // 8) * 8
        pad_c = Cp - C
        xp = jnp.pad(x, ((0, 0), (0, pad_c), (0, 0)))
        y, nrm, nrv = sync_batchnorm1d_train(
            xp, jnp.pad(weight, (0, pad_c)), jnp.pad(bias, (0, pad_c)),
            jnp.pad(running_mean, (0, pad_c)),
            jnp.pad(running_var, (0, pad_c), constant_values=1.0),
            eps=eps, momentum=momentum, max_block_bytes=max_block_bytes)
        return y[:, :C, :], nrm[:C], nrv[:C]

    # TODO(synk): lane occupancy is L/128 when L < 128; a lane-dense (C, N*L)
    # relayout variant would recover bandwidth for tiny-L workloads.
    if plan[0] == "fused":
        tc = plan[1]
        grid = (C // tc,)
        w2d = weight.reshape(C, 1).astype(jnp.float32)
        b2d = bias.reshape(C, 1).astype(jnp.float32)
        kernel = functools.partial(_bn_fused_kernel, eps=float(eps), n_total=n_total)
        y, mean2d, uvar2d = pl.pallas_call(
            kernel,
            out_shape=(
                jax.ShapeDtypeStruct((N, C, L), x.dtype),
                jax.ShapeDtypeStruct((C, 1), jnp.float32),
                jax.ShapeDtypeStruct((C, 1), jnp.float32),
            ),
            grid=grid,
            in_specs=[
                pl.BlockSpec((N, tc, L), lambda c: (0, c, 0)),
                pl.BlockSpec((tc, 1), lambda c: (c, 0)),
                pl.BlockSpec((tc, 1), lambda c: (c, 0)),
            ],
            out_specs=(
                pl.BlockSpec((N, tc, L), lambda c: (0, c, 0)),
                pl.BlockSpec((tc, 1), lambda c: (c, 0)),
                pl.BlockSpec((tc, 1), lambda c: (c, 0)),
            ),
            compiler_params=pltpu.CompilerParams(
                dimension_semantics=("parallel",),
                vmem_limit_bytes=vmem_limit),
        )(x, w2d, b2d)
        mean = mean2d[:, 0]
        unbias_var = uvar2d[:, 0]
    else:
        # two-phase: (1) per-channel sums accumulated over an N grid axis,
        #            (2) tiny per-channel math in plain JAX, (3) normalize pass.
        _, tc, tn = plan
        grid = (C // tc, N // tn)
        xsum2d, xsq2d = pl.pallas_call(
            _bn_stats_kernel,
            out_shape=(jax.ShapeDtypeStruct((C, 1), jnp.float32),
                       jax.ShapeDtypeStruct((C, 1), jnp.float32)),
            grid=grid,
            in_specs=[pl.BlockSpec((tn, tc, L), lambda c, n: (n, c, 0))],
            out_specs=(pl.BlockSpec((tc, 1), lambda c, n: (c, 0)),
                       pl.BlockSpec((tc, 1), lambda c, n: (c, 0))),
            compiler_params=pltpu.CompilerParams(
                dimension_semantics=("parallel", "arbitrary"),
                vmem_limit_bytes=vmem_limit),
        )(x)
        xsum = xsum2d[:, 0]
        xsq = xsq2d[:, 0]
        m = jnp.float32(n_total)
        mean = xsum / m
        sumvar = jnp.maximum(xsq - xsum * xsum / m, 0.0)
        inv_std = lax.rsqrt(sumvar / m + jnp.float32(eps))
        scale = weight.astype(jnp.float32) * inv_std
        shift = bias.astype(jnp.float32) - mean * scale
        unbias_var = sumvar / float(max(n_total - 1, 1))

        y = pl.pallas_call(
            _bn_norm_kernel,
            out_shape=jax.ShapeDtypeStruct((N, C, L), x.dtype),
            grid=grid,
            in_specs=[pl.BlockSpec((tn, tc, L), lambda c, n: (n, c, 0)),
                      pl.BlockSpec((tc, 1), lambda c, n: (c, 0)),
                      pl.BlockSpec((tc, 1), lambda c, n: (c, 0))],
            out_specs=pl.BlockSpec((tn, tc, L), lambda c, n: (n, c, 0)),
            compiler_params=pltpu.CompilerParams(
                dimension_semantics=("parallel", "parallel"),
                vmem_limit_bytes=vmem_limit),
        )(x, scale.reshape(C, 1), shift.reshape(C, 1))

    # running-statistics update (buffer math, stays in plain JAX)
    new_running_mean = (1.0 - momentum) * running_mean + momentum * mean
    new_running_var = (1.0 - momentum) * running_var + momentum * unbias_var
    return y, new_running_mean, new_running_var


def sync_batchnorm1d_eval(x, weight, bias, running_mean, running_var, eps=1e-5,
                          max_block_bytes=None):
    """Eval-mode forward: y = (x - running_mean) / sqrt(running_var + eps) * w + b."""
    N, C, L = x.shape
    itemsize = jnp.dtype(x.dtype).itemsize
    vmem_limit, block_budget = _vmem_plan()
    if max_block_bytes is not None:
        block_budget = int(max_block_bytes)
    plan = _plan(N, C, L, itemsize, block_budget)
    if plan[0] == "pad":
        Cp = ((C + 7) // 8) * 8
        pad_c = Cp - C
        y = sync_batchnorm1d_eval(
            jnp.pad(x, ((0, 0), (0, pad_c), (0, 0))),
            jnp.pad(weight, (0, pad_c)), jnp.pad(bias, (0, pad_c)),
            jnp.pad(running_mean, (0, pad_c)),
            jnp.pad(running_var, (0, pad_c), constant_values=1.0),
            eps=eps, max_block_bytes=max_block_bytes)
        return y[:, :C, :]
    tc = plan[1]
    tn = N if plan[0] == "fused" else plan[2]
    inv_std = lax.rsqrt(running_var.astype(jnp.float32) + jnp.float32(eps))
    scale = weight.astype(jnp.float32) * inv_std
    shift = bias.astype(jnp.float32) - running_mean.astype(jnp.float32) * scale
    grid = (C // tc, N // tn)
    return pl.pallas_call(
        _bn_norm_kernel,
        out_shape=jax.ShapeDtypeStruct((N, C, L), x.dtype),
        grid=grid,
        in_specs=[pl.BlockSpec((tn, tc, L), lambda c, n: (n, c, 0)),
                  pl.BlockSpec((tc, 1), lambda c, n: (c, 0)),
                  pl.BlockSpec((tc, 1), lambda c, n: (c, 0))],
        out_specs=pl.BlockSpec((tn, tc, L), lambda c, n: (n, c, 0)),
        compiler_params=pltpu.CompilerParams(
            dimension_semantics=("parallel", "parallel"),
            vmem_limit_bytes=vmem_limit),
    )(x, scale.reshape(C, 1), shift.reshape(C, 1))


# --------------------------------------------------------------------------- #
# Pure-JAX reference (mirrors the PyTorch training-mode math) and tests
# --------------------------------------------------------------------------- #
def _reference(x, weight, bias, running_mean, running_var, eps, momentum):
    N, C, L = x.shape
    n = N * L
    xsum = jnp.sum(x, axis=(0, 2))
    xsq = jnp.sum(x * x, axis=(0, 2))
    mean = xsum / n
    sumvar = xsq - xsum * xsum / n
    unbias_var = sumvar / (n - 1)
    std = jnp.sqrt(sumvar / n + eps)
    y = (x - mean[None, :, None]) / std[None, :, None] * weight[None, :, None] \
        + bias[None, :, None]
    new_rm = (1.0 - momentum) * running_mean + momentum * mean
    new_rv = (1.0 - momentum) * running_var + momentum * unbias_var
    return y, new_rm, new_rv


if __name__ == "__main__":
    eps, momentum = 1e-5, 0.1
    keys = jax.random.split(jax.random.PRNGKey(0), 10)

    def run_train_case(name, kx, kw, N, C, L, **kw_args):
        x = jax.random.normal(kx, (N, C, L), dtype=jnp.float32)
        w = jax.random.uniform(kw, (C,), dtype=jnp.float32)   # reset_parameters(): U[0,1)
        b = jnp.zeros((C,), jnp.float32)
        rm = jnp.zeros((C,), jnp.float32)
        rv = jnp.ones((C,), jnp.float32)
        y, nrm, nrv = sync_batchnorm1d_train(x, w, b, rm, rv, eps=eps,
                                             momentum=momentum, **kw_args)
        jax.block_until_ready((y, nrm, nrv))
        y_r, rm_r, rv_r = _reference(x, w, b, rm, rv, eps, momentum)
        assert y.shape == x.shape, name
        assert jnp.allclose(y, y_r, atol=1e-4, rtol=1e-4), name
        assert jnp.allclose(nrm, rm_r, atol=1e-5, rtol=1e-5), name
        assert jnp.allclose(nrv, rv_r, atol=1e-5, rtol=1e-5), name

    # 1) small case: single fused block (C=4 not 8-divisible but fits -> grid=(1,))
    run_train_case("small", keys[0], keys[1], 2, 4, 16)

    # 2) channel-tiled fused path (tc=8, grid=(2,))
    run_train_case("tiled", keys[2], keys[3], 2, 16, 128, channel_tile=8)

    # 3) forced two-phase path (stats accumulation over the N grid axis)
    run_train_case("two_phase", keys[4], keys[5], 4, 16, 128, max_block_bytes=60_000)

    # 4) forced channel-pad + two-phase path (C not 8-divisible, tiny budget)
    run_train_case("pad", keys[6], keys[7], 2, 6, 128, max_block_bytes=2_000)

    # 5) eval-mode forward (uses running statistics)
    N, C, L = 2, 4, 16
    xe = jax.random.normal(keys[8], (N, C, L), dtype=jnp.float32)
    we = jax.random.uniform(keys[9], (C,), dtype=jnp.float32)
    be = jnp.zeros((C,), jnp.float32)
    rme = 0.1 * jnp.arange(C, dtype=jnp.float32)
    rve = 0.5 + jnp.arange(C, dtype=jnp.float32) / C
    ye = sync_batchnorm1d_eval(xe, we, be, rme, rve, eps=eps)
    jax.block_until_ready(ye)
    std_e = jnp.sqrt(rve + eps)
    ye_ref = (xe - rme[None, :, None]) / std_e[None, :, None] * we[None, :, None] \
        + be[None, :, None]
    assert jnp.allclose(ye, ye_ref, atol=1e-4, rtol=1e-4)

    print("KERNEL_OK")
</pallas_src>

<mosaic_0001>
module attributes {stable_mosaic.version = 11 : i64} {
  func.func @_bn_fused_kernel(%arg0: i32, %arg1: memref<2x4x16xf32, #tpu.memory_space<vmem>>, %arg2: memref<4x1xf32, #tpu.memory_space<vmem>>, %arg3: memref<4x1xf32, #tpu.memory_space<vmem>>, %arg4: memref<2x4x16xf32, #tpu.memory_space<vmem>>, %arg5: memref<4x1xf32, #tpu.memory_space<vmem>>, %arg6: memref<4x1xf32, #tpu.memory_space<vmem>>) attributes {dimension_semantics = [#tpu.dimension_semantics<parallel>], iteration_bounds = array<i64: 1>, scalar_prefetch = 0 : i64, scratch_operands = 0 : i64, tpu.core_type = #tpu.core_type<tc>, window_params = [{transform_indices = @transform_0, window_bounds = array<i64: 2, 4, 16>}, {transform_indices = @transform_1, window_bounds = array<i64: 4, 1>}, {transform_indices = @transform_2, window_bounds = array<i64: 4, 1>}, {transform_indices = @transform_3, window_bounds = array<i64: 2, 4, 16>}, {transform_indices = @transform_4, window_bounds = array<i64: 4, 1>}, {transform_indices = @transform_5, window_bounds = array<i64: 4, 1>}]} {
    %c0 = arith.constant 0 : index
    %c0_0 = arith.constant 0 : index
    %c0_1 = arith.constant 0 : index
    %0 = vector.load %arg1[%c0, %c0_0, %c0_1] : memref<2x4x16xf32, #tpu.memory_space<vmem>>, vector<2x4x16xf32>
    %cst = arith.constant dense<0.000000e+00> : vector<4x16xf32>
    %1 = vector.multi_reduction <add>, %0, %cst [0] : vector<2x4x16xf32> to vector<4x16xf32>
    %2 = arith.mulf %0, %0 : vector<2x4x16xf32>
    %cst_2 = arith.constant dense<0.000000e+00> : vector<4x16xf32>
    %3 = vector.multi_reduction <add>, %2, %cst_2 [0] : vector<2x4x16xf32> to vector<4x16xf32>
    %cst_3 = arith.constant dense<0.000000e+00> : vector<4xf32>
    %4 = vector.multi_reduction <add>, %1, %cst_3 [1] : vector<4x16xf32> to vector<4xf32>
    %5 = vector.shape_cast %4 : vector<4xf32> to vector<4x1xf32>
    %cst_4 = arith.constant dense<0.000000e+00> : vector<4xf32>
    %6 = vector.multi_reduction <add>, %3, %cst_4 [1] : vector<4x16xf32> to vector<4xf32>
    %7 = vector.shape_cast %6 : vector<4xf32> to vector<4x1xf32>
    %cst_5 = arith.constant 3.200000e+01 : f32
    %8 = vector.broadcast %cst_5 : f32 to vector<4x1xf32>
    %9 = arith.divf %5, %8 : vector<4x1xf32>
    %10 = arith.mulf %5, %5 : vector<4x1xf32>
    %cst_6 = arith.constant 3.200000e+01 : f32
    %11 = vector.broadcast %cst_6 : f32 to vector<4x1xf32>
    %12 = arith.divf %10, %11 : vector<4x1xf32>
    %13 = arith.subf %7, %12 : vector<4x1xf32>
    %cst_7 = arith.constant 0.000000e+00 : f32
    %14 = vector.broadcast %cst_7 : f32 to vector<4x1xf32>
    %15 = arith.maximumf %13, %14 : vector<4x1xf32>
    %cst_8 = arith.constant 3.200000e+01 : f32
    %16 = vector.broadcast %cst_8 : f32 to vector<4x1xf32>
    %17 = arith.divf %15, %16 : vector<4x1xf32>
    %cst_9 = arith.constant 9.99999974E-6 : f32
    %18 = vector.broadcast %cst_9 : f32 to vector<4x1xf32>
    %19 = arith.addf %17, %18 : vector<4x1xf32>
    %20 = math.rsqrt %19 : vector<4x1xf32>
    %c0_10 = arith.constant 0 : index
    %c0_11 = arith.constant 0 : index
    %21 = vector.load %arg2[%c0_10, %c0_11] : memref<4x1xf32, #tpu.memory_space<vmem>>, vector<4x1xf32>
    %c0_12 = arith.constant 0 : index
    %c0_13 = arith.constant 0 : index
    %22 = vector.load %arg3[%c0_12, %c0_13] : memref<4x1xf32, #tpu.memory_space<vmem>>, vector<4x1xf32>
    %23 = arith.mulf %21, %20 : vector<4x1xf32>
    %24 = arith.mulf %9, %23 : vector<4x1xf32>
    %25 = arith.subf %22, %24 : vector<4x1xf32>
    %26 = vector.shape_cast %23 : vector<4x1xf32> to vector<1x4x1xf32>
    %27 = vector.shape_cast %25 : vector<4x1xf32> to vector<1x4x1xf32>
    %c0_14 = arith.constant 0 : index
    %c0_15 = arith.constant 0 : index
    %c0_16 = arith.constant 0 : index
    %28 = vector.load %arg1[%c0_14, %c0_15, %c0_16] : memref<2x4x16xf32, #tpu.memory_space<vmem>>, vector<2x4x16xf32>
    %29 = vector.broadcast %26 : vector<1x4x1xf32> to vector<2x4x16xf32>
    %30 = arith.mulf %28, %29 : vector<2x4x16xf32>
    %31 = vector.broadcast %27 : vector<1x4x1xf32> to vector<2x4x16xf32>
    %32 = arith.addf %30, %31 : vector<2x4x16xf32>
    %c0_17 = arith.constant 0 : index
    %c0_18 = arith.constant 0 : index
    %c0_19 = arith.constant 0 : index
    %33 = vector.load %arg4[%c0_17, %c0_18, %c0_19] : memref<2x4x16xf32, #tpu.memory_space<vmem>>, vector<2x4x16xf32>
    tpu.vector_store %arg4[%c0_17, %c0_18, %c0_19], %32 {strides = array<i32>} : memref<2x4x16xf32, #tpu.memory_space<vmem>>, vector<2x4x16xf32>,
    %c0_20 = arith.constant 0 : index
    %c0_21 = arith.constant 0 : index
    %34 = vector.load %arg5[%c0_20, %c0_21] : memref<4x1xf32, #tpu.memory_space<vmem>>, vector<4x1xf32>
    tpu.vector_store %arg5[%c0_20, %c0_21], %9 {strides = array<i32>} : memref<4x1xf32, #tpu.memory_space<vmem>>, vector<4x1xf32>,
    %cst_22 = arith.constant 3.100000e+01 : f32
    %35 = vector.broadcast %cst_22 : f32 to vector<4x1xf32>
    %36 = arith.divf %15, %35 : vector<4x1xf32>
    %c0_23 = arith.constant 0 : index
    %c0_24 = arith.constant 0 : index
    %37 = vector.load %arg6[%c0_23, %c0_24] : memref<4x1xf32, #tpu.memory_space<vmem>>, vector<4x1xf32>
    tpu.vector_store %arg6[%c0_23, %c0_24], %36 {strides = array<i32>} : memref<4x1xf32, #tpu.memory_space<vmem>>, vector<4x1xf32>,
    return
  }
  func.func @transform_0(%arg0: i32) -> (i32, i32, i32) {
    %c0_i32 = arith.constant 0 : i32
    %c0_i32_0 = arith.constant 0 : i32
    %c0_i32_1 = arith.constant 0 : i32
    return %c0_i32, %arg0, %c0_i32_0 : i32, i32, i32
  }
  func.func @transform_1(%arg0: i32) -> (i32, i32) {
    %c0_i32 = arith.constant 0 : i32
    %c0_i32_0 = arith.constant 0 : i32
    return %arg0, %c0_i32 : i32, i32
  }
  func.func @transform_2(%arg0: i32) -> (i32, i32) {
    %c0_i32 = arith.constant 0 : i32
    %c0_i32_0 = arith.constant 0 : i32
    return %arg0, %c0_i32 : i32, i32
  }
  func.func @transform_3(%arg0: i32) -> (i32, i32, i32) {
    %c0_i32 = arith.constant 0 : i32
    %c0_i32_0 = arith.constant 0 : i32
    %c0_i32_1 = arith.constant 0 : i32
    return %c0_i32, %arg0, %c0_i32_0 : i32, i32, i32
  }
  func.func @transform_4(%arg0: i32) -> (i32, i32) {
    %c0_i32 = arith.constant 0 : i32
    %c0_i32_0 = arith.constant 0 : i32
    return %arg0, %c0_i32 : i32, i32
  }
  func.func @transform_5(%arg0: i32) -> (i32, i32) {
    %c0_i32 = arith.constant 0 : i32
    %c0_i32_0 = arith.constant 0 : i32
    return %arg0, %c0_i32 : i32, i32
  }
}

</mosaic_0001>

<llo_original>
// kernel: tpu_custom_call.1
$region0: #{tpu_custom_call.1}
  #allocation0 [shape = 'u32[]', space=smem, size = 0x4, offset = 0x4, fixed_abs, tag = 'smem constant byte address 0x4 - core index']
  #allocation1 [shape = 'u32[144,128]{1,0:T(1,128)}', space=vmem, size = 0x12000, scoped, tag = 'internal scratch']
  %s0 = inlined_call_operand.vmem [shape: f32[2,4,16], index: 0, kind: input, shape index: {}]
  %s1 = inlined_call_operand.vmem [shape: f32[4,1], index: 1, kind: input, shape index: {}]
  %s2 = inlined_call_operand.vmem [shape: f32[4,1], index: 2, kind: input, shape index: {}]
  %s3 = inlined_call_operand.hbm [shape: f32[2,4,16], index: 3, kind: output, shape index: {0}]
  %s4 = inlined_call_operand.vmem [shape: f32[4,1], index: 4, kind: output, shape index: {1}]
  %s5 = inlined_call_operand.vmem [shape: f32[4,1], index: 5, kind: output, shape index: {2}]
  %6 = xla_tuple %s3, %s4, %s5
  %s7 = sld [smem:[#allocation0]]
  $region38: #{tpu_custom_call.1} parent=0
    _
  %s9 = ssub.s32 1, %s7
  %s10 = scalar_select 0, %s9, %s7
  $region1: #{tpu_custom_call.1} parent=0
    #allocation2 [shape = 'u8[4096]{0}', space=vmem, size = 0x1000, scoped, tag = 'output window, operand 0, single buffered']
    #allocation3 [shape = 's32[1]{0}', space=sflag, size = 0x4, scoped, tag = 'scoped memory for tpu_custom_call.1']
    %11 = vsyncpa [#allocation3], 0
    // Predicated region
    $region2: #{tpu_custom_call.1} parent=1 // pred_check
      _
    $region3: #{tpu_custom_call.1} parent=1 // pred_check_branch
      %13 = sbr.rel (0) target = $region5
    $region4: #{tpu_custom_call.1} parent=1 // pred_region
      _
    $region5: #{tpu_custom_call.1} parent=1 // pred_fallthru
      _
    // Predicated region
    $region6: #{tpu_custom_call.1} parent=1 // pred_check
      _
    $region7: #{tpu_custom_call.1} parent=1 // pred_check_branch
      %15 = sbr.rel (0) target = $region9
    $region8: #{tpu_custom_call.1} parent=1 // pred_region
      _
    $region9: #{tpu_custom_call.1} parent=1 // pred_fallthru
      _
    // Predicated region
    $region10: #{tpu_custom_call.1} parent=1 // pred_check
      _
    $region11: #{tpu_custom_call.1} parent=1 // pred_check_branch
      %17 = sbr.rel (0) target = $region13
    $region12: #{tpu_custom_call.1} parent=1 // pred_region
      _
    $region13: #{tpu_custom_call.1} parent=1 // pred_fallthru
      _
    %v18 = vld [vmem:[%s0] sm:$0xf]
    %v19 = vld [vmem:[%s0 + $0x4] sm:$0xf]
    %vm20 = vcmask 125952
    %v21 = vsel %vm20, %v18, 0.0
    %v22 = vsel %vm20, %v19, 0.0
    %v23 = vadd.f32 %v21, %v22
    %v24 = vmul.f32 %v18, %v18
    %v25 = vmul.f32 %v19, %v19
    %v26 = vsel %vm20, %v24, 0.0
    %v27 = vsel %vm20, %v25, 0.0
    %v28 = vadd.f32 %v26, %v27
    %v29 = vsel %vm20, %v23, 0.0
    %30 = vadd.xlane.f32.xlu0 %v29
    %v31 = vpop.xlane.xlu0 %30
    %v32 = vsel %vm20, %v28, 0.0
    %33 = vadd.xlane.f32.xlu0 %v32
    %v34 = vpop.xlane.xlu0 %33
    %v35 = vrcp.pop 32.0
    %v36 = vmul.f32 %v31, %v35
    %v37 = vmul.f32 %v31, %v31
    %v38 = vmul.f32 %v37, %v35
    %v39 = vsub.f32 %v34, %v38
    %v40 = vmax.f32 %v39, 0.0
    %v41 = vmul.f32 %v40, %v35
    %v42 = vadd.f32 %v41, 1e-05
    %v43 = vrsqrt.pop %v42
    %v44 = vld [vmem:[%s1] sm:$0xf]
    %v45 = vld [vmem:[%s2] sm:$0xf]
    %v46 = vmul.f32 %v44, %v43
    %v47 = vmul.f32 %v36, %v46
    %v48 = vsub.f32 %v45, %v47
    %50 = vset.pattern.permute.xlu0 0
    %51 = vperm.xlu0 %50, %v46
    %v52 = vpop.permute.xlu0 %51
    %v54 = vmul.f32 %v18, %v52
    %v55 = vmul.f32 %v19, %v52
    %57 = vset.pattern.permute.xlu0 0
    %58 = vperm.xlu0 %57, %v48
    %v59 = vpop.permute.xlu0 %58
    %v61 = vadd.f32 %v54, %v59
    %v62 = vadd.f32 %v55, %v59
    %63 = vst.msk [vmem:[#allocation2] sm:$0xf] %vm20, %v61
    %64 = vst.msk [vmem:[#allocation2 + $0x4] sm:$0xf] %vm20, %v62
    %vm65 = vcmask 3072
    %66 = vst.msk [vmem:[%s4] sm:$0xf] %vm65, %v36
    %v67 = vrcp.pop 31.0
    %v68 = vmul.f32 %v40, %v67
    %69 = vst.msk [vmem:[%s5] sm:$0xf] %vm65, %v68
    // Predicated region
    $region14: #{tpu_custom_call.1} parent=1 // pred_check
      _
    $region15: #{tpu_custom_call.1} parent=1 // pred_check_branch
      %71 = sbr.rel (0) target = $region17
    $region16: #{tpu_custom_call.1} parent=1 // pred_region
      %s73 = ssub.s32 128, 128
      %74 = vsyncadd [#allocation3], %s73
      %s75 = sshll.u32 [#allocation2], 4
      %s76 = int_to_ptr.vmem [resolvable:$true] %s75
      %81 = dma.vmem_to_hbm [thread:$0]  %s76, 128, %s3, [#allocation3], 64, 64, 4
    $region17: #{tpu_custom_call.1} parent=1 // pred_fallthru
      _
    // Predicated region
    $region18: #{tpu_custom_call.1} parent=1 // pred_check
      _
    $region19: #{tpu_custom_call.1} parent=1 // pred_check_branch
      %83 = sbr.rel (0) target = $region21
    $region20: #{tpu_custom_call.1} parent=1 // pred_region
      _
    $region21: #{tpu_custom_call.1} parent=1 // pred_fallthru
      _
    // Predicated region
    $region22: #{tpu_custom_call.1} parent=1 // pred_check
      _
    $region23: #{tpu_custom_call.1} parent=1 // pred_check_branch
      %85 = sbr.rel (0) target = $region25
    $region24: #{tpu_custom_call.1} parent=1 // pred_region
      _
    $region25: #{tpu_custom_call.1} parent=1 // pred_fallthru
      _
    // Predicated region
    $region26: #{tpu_custom_call.1} parent=1 // pred_check
      _
    $region27: #{tpu_custom_call.1} parent=1 // pred_check_branch
      %87 = sbr.rel (0) target = $region29
    $region28: #{tpu_custom_call.1} parent=1 // pred_region
      %88 = dma.done [#allocation3], 128
    $region29: #{tpu_custom_call.1} parent=1 // pred_fallthru
      _
    // Predicated region
    $region30: #{tpu_custom_call.1} parent=1 // pred_check
      _
    $region31: #{tpu_custom_call.1} parent=1 // pred_check_branch
      %90 = sbr.rel (0) target = $region33
    $region32: #{tpu_custom_call.1} parent=1 // pred_region
      _
    $region33: #{tpu_custom_call.1} parent=1 // pred_fallthru
      _
    // Predicated region
    $region34: #{tpu_custom_call.1} parent=1 // pred_check
      _
    $region35: #{tpu_custom_call.1} parent=1 // pred_check_branch
      %92 = sbr.rel (0) target = $region37
    $region36: #{tpu_custom_call.1} parent=1 // pred_region
      _
    $region37: #{tpu_custom_call.1} parent=1 // pred_fallthru
      _
    %93 = vsyncpa [#allocation3], 1

</llo_original>
